<compile_context>
chip_gen: v6e
topology: v6e:2x2x1
jax: 0.10.0
libtpu: 0.0.40
codegen_flags: <defaults>
</compile_context>

<pallas_src>
import jax
import jax.numpy as jnp
from jax import lax
from jax.experimental import pallas as pl
from jax.experimental.pallas import tpu as pltpu


def _round_up(v, m):
    return ((v + m - 1) // m) * m


def _mlp_kernel(x_ref,
                w1_ref, b1_ref,
                w2_ref, b2_ref,
                w3_ref, b3_ref,
                w4_ref, b4_ref,
                o_ref):
    # x_ref: (TB, 30) -- native (batch, features) layout, batch on sublanes.
    x = x_ref[...]
    # fc1 + relu: W1 (16,30) . x (TB,30) contracted over the 30-dim -> (16, TB).
    # The transposed contraction puts the batch on the 128-lane axis for the
    # rest of the chain and the final lane-dense store.
    h = lax.dot_general(w1_ref[...], x, (((1,), (1,)), ((), ())),
                        preferred_element_type=jnp.float32)
    h = jnp.maximum(h + b1_ref[...], 0.0)
    # fc2 + relu: (8,16) @ (16,TB) -> (8,TB)
    h = jnp.dot(w2_ref[...], h, preferred_element_type=jnp.float32)
    h = jnp.maximum(h + b2_ref[...], 0.0)
    # fc3 + relu: (8,8) @ (8,TB) -> (8,TB)
    h = jnp.dot(w3_ref[...], h, preferred_element_type=jnp.float32)
    h = jnp.maximum(h + b3_ref[...], 0.0)
    # fc4 (no activation): (3,8) @ (8,TB) -> (3,TB), lane-dense store.
    h = jnp.dot(w4_ref[...], h, preferred_element_type=jnp.float32)
    o_ref[...] = (h + b4_ref[...]).astype(o_ref.dtype)


def net_forward(x, params, *, tile_b=8192):
    """Forward pass matching PyTorch `Net`.

    x: (B, 30) float32.
    params: dict of w_i with shape (out, in) [PyTorch-native] and b_i (out, 1).
    Returns (B, 3) float32.
    """
    assert tile_b % 128 == 0, "batch tile must be a multiple of 128 lanes"
    B, F = x.shape
    assert F == 30, f"expected 30 input features, got {F}"
    w1, b1 = params["w1"], params["b1"]
    w2, b2 = params["w2"], params["b2"]
    w3, b3 = params["w3"], params["b3"]
    w4, b4 = params["w4"], params["b4"]

    x = x.astype(jnp.float32)

    # Pad the batch dim only up to a multiple of 128 (lane alignment).  For
    # production batch sizes that are already 128-aligned this is a no-op.
    Bp = _round_up(B, 128)
    if Bp != B:
        x = jnp.pad(x, ((0, Bp - B), (0, 0)))

    # Batch tile: as large as tile_b, but guarantee >= 2 grid steps whenever
    # possible so v7x can shard the batch across both TensorCores.
    TB = min(tile_b, Bp)
    if Bp > 128:
        TB = min(TB, max(128, _round_up(-(-Bp // 2), 128)))
    grid = (pl.cdiv(Bp, TB),)

    # x / out blocks follow the batch grid; weights & biases are VMEM-resident
    # (constant index_map -> fetched once, reused every grid step).
    x_spec = pl.BlockSpec((TB, 30), lambda i: (i, 0))
    out_spec = pl.BlockSpec((3, TB), lambda i: (0, i))
    resident = lambda shape: pl.BlockSpec(shape, lambda i: (0, 0))

    out_t = pl.pallas_call(
        _mlp_kernel,
        out_shape=jax.ShapeDtypeStruct((3, Bp), jnp.float32),
        grid=grid,
        in_specs=[
            x_spec,
            resident(w1.shape), resident(b1.shape),
            resident(w2.shape), resident(b2.shape),
            resident(w3.shape), resident(b3.shape),
            resident(w4.shape), resident(b4.shape),
        ],
        out_specs=out_spec,
        compiler_params=pltpu.CompilerParams(
            dimension_semantics=("parallel",),
            vmem_limit_bytes=32 * 1024 * 1024),
    )(x, w1, b1, w2, b2, w3, b3, w4, b4)

    # Back to the PyTorch (batch, features) layout.  Consumers that can accept
    # the lane-dense (3, B) layout directly should drop this transpose.
    return out_t[:, :B].T


def init_params(key):
    """Deterministic init matching nn.Linear (weights stored as (out, in))."""
    dims = [(30, 16), (16, 8), (8, 8), (8, 3)]  # (fan_in, fan_out)
    params = {}
    keys = jax.random.split(key, 2 * len(dims))
    for i, (fan_in, fan_out) in enumerate(dims):
        bound = 1.0 / jnp.sqrt(fan_in)
        w = jax.random.uniform(keys[2 * i], (fan_out, fan_in),
                               minval=-bound, maxval=bound, dtype=jnp.float32)
        b = jax.random.uniform(keys[2 * i + 1], (fan_out, 1),
                               minval=-bound, maxval=bound, dtype=jnp.float32)
        params[f"w{i + 1}"] = w
        params[f"b{i + 1}"] = b
    return params


def _reference(x, params):
    # Plain-JAX reference in the PyTorch convention: y = x @ W.T + b.
    h = jnp.maximum(x @ params["w1"].T + params["b1"].T, 0.0)
    h = jnp.maximum(h @ params["w2"].T + params["b2"].T, 0.0)
    h = jnp.maximum(h @ params["w3"].T + params["b3"].T, 0.0)
    return h @ params["w4"].T + params["b4"].T


if __name__ == "__main__":
    key = jax.random.PRNGKey(0)
    pkey, xkey, xkey2 = jax.random.split(key, 3)
    params = init_params(pkey)

    # Small demo batch (single grid step, batch padded 8 -> 128).
    batch = 8
    x = jax.random.normal(xkey, (batch, 30), dtype=jnp.float32)
    out = jax.block_until_ready(net_forward(x, params))
    ref = _reference(x, params)
    assert out.shape == (batch, 3), out.shape
    assert jnp.allclose(out, ref, atol=1e-4, rtol=1e-4), \
        "mismatch vs JAX reference (B=8)"

    # Larger batch exercising a multi-step grid plus a non-divisible tail
    # block (B=300 -> Bp=384, TB=256 -> grid of 2 with a clamped last block).
    batch2 = 300
    x2 = jax.random.normal(xkey2, (batch2, 30), dtype=jnp.float32)
    out2 = jax.block_until_ready(net_forward(x2, params, tile_b=256))
    ref2 = _reference(x2, params)
    assert out2.shape == (batch2, 3), out2.shape
    assert jnp.allclose(out2, ref2, atol=1e-4, rtol=1e-4), \
        "mismatch vs JAX reference (B=300)"

    print("KERNEL_OK")
</pallas_src>

<mosaic_0001>
module attributes {stable_mosaic.version = 11 : i64} {
  func.func @_mlp_kernel(%arg0: i32, %arg1: memref<128x30xf32, #tpu.memory_space<vmem>>, %arg2: memref<16x30xf32, #tpu.memory_space<vmem>>, %arg3: memref<16x1xf32, #tpu.memory_space<vmem>>, %arg4: memref<8x16xf32, #tpu.memory_space<vmem>>, %arg5: memref<8x1xf32, #tpu.memory_space<vmem>>, %arg6: memref<8x8xf32, #tpu.memory_space<vmem>>, %arg7: memref<8x1xf32, #tpu.memory_space<vmem>>, %arg8: memref<3x8xf32, #tpu.memory_space<vmem>>, %arg9: memref<3x1xf32, #tpu.memory_space<vmem>>, %arg10: memref<3x128xf32, #tpu.memory_space<vmem>>) attributes {dimension_semantics = [#tpu.dimension_semantics<parallel>], iteration_bounds = array<i64: 1>, scalar_prefetch = 0 : i64, scratch_operands = 0 : i64, tpu.core_type = #tpu.core_type<tc>, window_params = [{transform_indices = @transform_0, window_bounds = array<i64: 128, 30>}, {pipeline_mode = #tpu.pipeline_mode<synchronous>, transform_indices = @transform_1, window_bounds = array<i64: 16, 30>}, {pipeline_mode = #tpu.pipeline_mode<synchronous>, transform_indices = @transform_2, window_bounds = array<i64: 16, 1>}, {pipeline_mode = #tpu.pipeline_mode<synchronous>, transform_indices = @transform_3, window_bounds = array<i64: 8, 16>}, {pipeline_mode = #tpu.pipeline_mode<synchronous>, transform_indices = @transform_4, window_bounds = array<i64: 8, 1>}, {pipeline_mode = #tpu.pipeline_mode<synchronous>, transform_indices = @transform_5, window_bounds = array<i64: 8, 8>}, {pipeline_mode = #tpu.pipeline_mode<synchronous>, transform_indices = @transform_6, window_bounds = array<i64: 8, 1>}, {pipeline_mode = #tpu.pipeline_mode<synchronous>, transform_indices = @transform_7, window_bounds = array<i64: 3, 8>}, {pipeline_mode = #tpu.pipeline_mode<synchronous>, transform_indices = @transform_8, window_bounds = array<i64: 3, 1>}, {transform_indices = @transform_9, window_bounds = array<i64: 3, 128>}]} {
    %c0 = arith.constant 0 : index
    %c0_0 = arith.constant 0 : index
    %0 = vector.load %arg1[%c0, %c0_0] : memref<128x30xf32, #tpu.memory_space<vmem>>, vector<128x30xf32>
    %c0_1 = arith.constant 0 : index
    %c0_2 = arith.constant 0 : index
    %1 = vector.load %arg2[%c0_1, %c0_2] : memref<16x30xf32, #tpu.memory_space<vmem>>, vector<16x30xf32>
    %cst = arith.constant dense<0.000000e+00> : vector<16x128xf32>
    %2 = tpu.matmul %1, %0, %cst {dimension_numbers = #tpu.dot_dimension_numbers<[1], [1], [0], [0], [0, 0, 1, 0], [], []>} : vector<16x30xf32>, vector<128x30xf32>, vector<16x128xf32> -> vector<16x128xf32>
    %c0_3 = arith.constant 0 : index
    %c0_4 = arith.constant 0 : index
    %3 = vector.load %arg3[%c0_3, %c0_4] : memref<16x1xf32, #tpu.memory_space<vmem>>, vector<16x1xf32>
    %4 = vector.broadcast %3 : vector<16x1xf32> to vector<16x128xf32>
    %5 = arith.addf %2, %4 : vector<16x128xf32>
    %cst_5 = arith.constant 0.000000e+00 : f32
    %6 = vector.broadcast %cst_5 : f32 to vector<16x128xf32>
    %7 = arith.maximumf %5, %6 : vector<16x128xf32>
    %c0_6 = arith.constant 0 : index
    %c0_7 = arith.constant 0 : index
    %8 = vector.load %arg4[%c0_6, %c0_7] : memref<8x16xf32, #tpu.memory_space<vmem>>, vector<8x16xf32>
    %cst_8 = arith.constant dense<0.000000e+00> : vector<8x128xf32>
    %9 = tpu.matmul %8, %7, %cst_8 {dimension_numbers = #tpu.dot_dimension_numbers<[1], [0], [0], [1], [0, 0, 1, 1], [], []>} : vector<8x16xf32>, vector<16x128xf32>, vector<8x128xf32> -> vector<8x128xf32>
    %c0_9 = arith.constant 0 : index
    %c0_10 = arith.constant 0 : index
    %10 = vector.load %arg5[%c0_9, %c0_10] : memref<8x1xf32, #tpu.memory_space<vmem>>, vector<8x1xf32>
    %11 = vector.broadcast %10 : vector<8x1xf32> to vector<8x128xf32>
    %12 = arith.addf %9, %11 : vector<8x128xf32>
    %cst_11 = arith.constant 0.000000e+00 : f32
    %13 = vector.broadcast %cst_11 : f32 to vector<8x128xf32>
    %14 = arith.maximumf %12, %13 : vector<8x128xf32>
    %c0_12 = arith.constant 0 : index
    %c0_13 = arith.constant 0 : index
    %15 = vector.load %arg6[%c0_12, %c0_13] : memref<8x8xf32, #tpu.memory_space<vmem>>, vector<8x8xf32>
    %cst_14 = arith.constant dense<0.000000e+00> : vector<8x128xf32>
    %16 = tpu.matmul %15, %14, %cst_14 {dimension_numbers = #tpu.dot_dimension_numbers<[1], [0], [0], [1], [0, 0, 1, 1], [], []>} : vector<8x8xf32>, vector<8x128xf32>, vector<8x128xf32> -> vector<8x128xf32>
    %c0_15 = arith.constant 0 : index
    %c0_16 = arith.constant 0 : index
    %17 = vector.load %arg7[%c0_15, %c0_16] : memref<8x1xf32, #tpu.memory_space<vmem>>, vector<8x1xf32>
    %18 = vector.broadcast %17 : vector<8x1xf32> to vector<8x128xf32>
    %19 = arith.addf %16, %18 : vector<8x128xf32>
    %cst_17 = arith.constant 0.000000e+00 : f32
    %20 = vector.broadcast %cst_17 : f32 to vector<8x128xf32>
    %21 = arith.maximumf %19, %20 : vector<8x128xf32>
    %c0_18 = arith.constant 0 : index
    %c0_19 = arith.constant 0 : index
    %22 = vector.load %arg8[%c0_18, %c0_19] : memref<3x8xf32, #tpu.memory_space<vmem>>, vector<3x8xf32>
    %cst_20 = arith.constant dense<0.000000e+00> : vector<3x128xf32>
    %23 = tpu.matmul %22, %21, %cst_20 {dimension_numbers = #tpu.dot_dimension_numbers<[1], [0], [0], [1], [0, 0, 1, 1], [], []>} : vector<3x8xf32>, vector<8x128xf32>, vector<3x128xf32> -> vector<3x128xf32>
    %c0_21 = arith.constant 0 : index
    %c0_22 = arith.constant 0 : index
    %24 = vector.load %arg9[%c0_21, %c0_22] : memref<3x1xf32, #tpu.memory_space<vmem>>, vector<3x1xf32>
    %25 = vector.broadcast %24 : vector<3x1xf32> to vector<3x128xf32>
    %26 = arith.addf %23, %25 : vector<3x128xf32>
    %c0_23 = arith.constant 0 : index
    %c0_24 = arith.constant 0 : index
    %27 = vector.load %arg10[%c0_23, %c0_24] : memref<3x128xf32, #tpu.memory_space<vmem>>, vector<3x128xf32>
    tpu.vector_store %arg10[%c0_23, %c0_24], %26 {strides = array<i32>} : memref<3x128xf32, #tpu.memory_space<vmem>>, vector<3x128xf32>,
    return
  }
  func.func @transform_0(%arg0: i32) -> (i32, i32) {
    %c0_i32 = arith.constant 0 : i32
    %c0_i32_0 = arith.constant 0 : i32
    return %arg0, %c0_i32 : i32, i32
  }
  func.func @transform_1(%arg0: i32) -> (i32, i32) {
    %c0_i32 = arith.constant 0 : i32
    %c0_i32_0 = arith.constant 0 : i32
    %c0_i32_1 = arith.constant 0 : i32
    return %c0_i32, %c0_i32_0 : i32, i32
  }
  func.func @transform_2(%arg0: i32) -> (i32, i32) {
    %c0_i32 = arith.constant 0 : i32
    %c0_i32_0 = arith.constant 0 : i32
    %c0_i32_1 = arith.constant 0 : i32
    return %c0_i32, %c0_i32_0 : i32, i32
  }
  func.func @transform_3(%arg0: i32) -> (i32, i32) {
    %c0_i32 = arith.constant 0 : i32
    %c0_i32_0 = arith.constant 0 : i32
    %c0_i32_1 = arith.constant 0 : i32
    return %c0_i32, %c0_i32_0 : i32, i32
  }
  func.func @transform_4(%arg0: i32) -> (i32, i32) {
    %c0_i32 = arith.constant 0 : i32
    %c0_i32_0 = arith.constant 0 : i32
    %c0_i32_1 = arith.constant 0 : i32
    return %c0_i32, %c0_i32_0 : i32, i32
  }
  func.func @transform_5(%arg0: i32) -> (i32, i32) {
    %c0_i32 = arith.constant 0 : i32
    %c0_i32_0 = arith.constant 0 : i32
    %c0_i32_1 = arith.constant 0 : i32
    return %c0_i32, %c0_i32_0 : i32, i32
  }
  func.func @transform_6(%arg0: i32) -> (i32, i32) {
    %c0_i32 = arith.constant 0 : i32
    %c0_i32_0 = arith.constant 0 : i32
    %c0_i32_1 = arith.constant 0 : i32
    return %c0_i32, %c0_i32_0 : i32, i32
  }
  func.func @transform_7(%arg0: i32) -> (i32, i32) {
    %c0_i32 = arith.constant 0 : i32
    %c0_i32_0 = arith.constant 0 : i32
    %c0_i32_1 = arith.constant 0 : i32
    return %c0_i32, %c0_i32_0 : i32, i32
  }
  func.func @transform_8(%arg0: i32) -> (i32, i32) {
    %c0_i32 = arith.constant 0 : i32
    %c0_i32_0 = arith.constant 0 : i32
    %c0_i32_1 = arith.constant 0 : i32
    return %c0_i32, %c0_i32_0 : i32, i32
  }
  func.func @transform_9(%arg0: i32) -> (i32, i32) {
    %c0_i32 = arith.constant 0 : i32
    %c0_i32_0 = arith.constant 0 : i32
    return %c0_i32, %arg0 : i32, i32
  }
}

</mosaic_0001>

<llo_original>
// kernel: tpu_custom_call.1
$region0: #{tpu_custom_call.1}
  #allocation0 [shape = 'u32[]', space=smem, size = 0x4, offset = 0x4, fixed_abs, tag = 'smem constant byte address 0x4 - core index']
  #allocation1 [shape = 'u32[144,128]{1,0:T(1,128)}', space=vmem, size = 0x12000, scoped, tag = 'internal scratch']
  %s0 = inlined_call_operand.vmem [shape: f32[128,30], index: 0, kind: input, shape index: {}]
  %s1 = inlined_call_operand.vmem [shape: f32[16,30], index: 1, kind: input, shape index: {}]
  %s2 = inlined_call_operand.vmem [shape: f32[16,1], index: 2, kind: input, shape index: {}]
  %s3 = inlined_call_operand.vmem [shape: f32[8,16], index: 3, kind: input, shape index: {}]
  %s4 = inlined_call_operand.vmem [shape: f32[8,1], index: 4, kind: input, shape index: {}]
  %s5 = inlined_call_operand.vmem [shape: f32[8,8], index: 5, kind: input, shape index: {}]
  %s6 = inlined_call_operand.vmem [shape: f32[8,1], index: 6, kind: input, shape index: {}]
  %s7 = inlined_call_operand.vmem [shape: f32[3,8], index: 7, kind: input, shape index: {}]
  %s8 = inlined_call_operand.vmem [shape: f32[3,1], index: 8, kind: input, shape index: {}]
  %s9 = inlined_call_operand.hbm [shape: f32[3,128], index: 9, kind: output, shape index: {}]
  %s10 = sld [smem:[#allocation0]]
  $region46: #{tpu_custom_call.1} parent=0
    _
  %s12 = ssub.s32 1, %s10
  %s13 = scalar_select 0, %s12, %s10
  $region1: #{tpu_custom_call.1} parent=0
    #allocation2 [shape = 'u8[2048]{0}', space=vmem, size = 0x800, scoped, tag = 'output window, operand 0, single buffered']
    #allocation3 [shape = 's32[1]{0}', space=sflag, size = 0x4, scoped, tag = 'scoped memory for tpu_custom_call.1']
    %14 = vsyncpa [#allocation3], 0
    // Predicated region
    $region2: #{tpu_custom_call.1} parent=1 // pred_check
      _
    $region3: #{tpu_custom_call.1} parent=1 // pred_check_branch
      %16 = sbr.rel (0) target = $region5
    $region4: #{tpu_custom_call.1} parent=1 // pred_region
      _
    $region5: #{tpu_custom_call.1} parent=1 // pred_fallthru
      _
    // Predicated region
    $region6: #{tpu_custom_call.1} parent=1 // pred_check
      _
    $region7: #{tpu_custom_call.1} parent=1 // pred_check_branch
      %18 = sbr.rel (0) target = $region9
    $region8: #{tpu_custom_call.1} parent=1 // pred_region
      _
    $region9: #{tpu_custom_call.1} parent=1 // pred_fallthru
      _
    // Predicated region
    $region10: #{tpu_custom_call.1} parent=1 // pred_check
      _
    $region11: #{tpu_custom_call.1} parent=1 // pred_check_branch
      %20 = sbr.rel (0) target = $region13
    $region12: #{tpu_custom_call.1} parent=1 // pred_region
      _
    $region13: #{tpu_custom_call.1} parent=1 // pred_fallthru
      _
    // Predicated region
    $region14: #{tpu_custom_call.1} parent=1 // pred_check
      _
    $region15: #{tpu_custom_call.1} parent=1 // pred_check_branch
      %22 = sbr.rel (0) target = $region17
    $region16: #{tpu_custom_call.1} parent=1 // pred_region
      _
    $region17: #{tpu_custom_call.1} parent=1 // pred_fallthru
      _
    // Predicated region
    $region18: #{tpu_custom_call.1} parent=1 // pred_check
      _
    $region19: #{tpu_custom_call.1} parent=1 // pred_check_branch
      %24 = sbr.rel (0) target = $region21
    $region20: #{tpu_custom_call.1} parent=1 // pred_region
      _
    $region21: #{tpu_custom_call.1} parent=1 // pred_fallthru
      _
    // Predicated region
    $region22: #{tpu_custom_call.1} parent=1 // pred_check
      _
    $region23: #{tpu_custom_call.1} parent=1 // pred_check_branch
      %26 = sbr.rel (0) target = $region25
    $region24: #{tpu_custom_call.1} parent=1 // pred_region
      _
    $region25: #{tpu_custom_call.1} parent=1 // pred_fallthru
      _
    // Predicated region
    $region26: #{tpu_custom_call.1} parent=1 // pred_check
      _
    $region27: #{tpu_custom_call.1} parent=1 // pred_check_branch
      %28 = sbr.rel (0) target = $region29
    $region28: #{tpu_custom_call.1} parent=1 // pred_region
      _
    $region29: #{tpu_custom_call.1} parent=1 // pred_fallthru
      _
    // Predicated region
    $region30: #{tpu_custom_call.1} parent=1 // pred_check
      _
    $region31: #{tpu_custom_call.1} parent=1 // pred_check_branch
      %30 = sbr.rel (0) target = $region33
    $region32: #{tpu_custom_call.1} parent=1 // pred_region
      _
    $region33: #{tpu_custom_call.1} parent=1 // pred_fallthru
      _
    // Predicated region
    $region34: #{tpu_custom_call.1} parent=1 // pred_check
      _
    $region35: #{tpu_custom_call.1} parent=1 // pred_check_branch
      %32 = sbr.rel (0) target = $region37
    $region36: #{tpu_custom_call.1} parent=1 // pred_region
      _
    $region37: #{tpu_custom_call.1} parent=1 // pred_fallthru
      _
    %v33 = vld [vmem:[%s0] sm:$0xff]
    %v34 = vld [vmem:[%s0 + $0x8] sm:$0xff]
    %v35 = vld [vmem:[%s0 + $0x10] sm:$0xff]
    %v36 = vld [vmem:[%s0 + $0x18] sm:$0xff]
    %v37 = vld [vmem:[%s0 + $0x20] sm:$0xff]
    %v38 = vld [vmem:[%s0 + $0x28] sm:$0xff]
    %v39 = vld [vmem:[%s0 + $0x30] sm:$0xff]
    %v40 = vld [vmem:[%s0 + $0x38] sm:$0xff]
    %v41 = vld [vmem:[%s0 + $0x40] sm:$0xff]
    %v42 = vld [vmem:[%s0 + $0x48] sm:$0xff]
    %v43 = vld [vmem:[%s0 + $0x50] sm:$0xff]
    %v44 = vld [vmem:[%s0 + $0x58] sm:$0xff]
    %v45 = vld [vmem:[%s0 + $0x60] sm:$0xff]
    %v46 = vld [vmem:[%s0 + $0x68] sm:$0xff]
    %v47 = vld [vmem:[%s0 + $0x70] sm:$0xff]
    %v48 = vld [vmem:[%s0 + $0x78] sm:$0xff]
    %v49 = vld [vmem:[%s1] sm:$0xff]
    %v50 = vld [vmem:[%s1 + $0x8] sm:$0xff]
    %v51 = vld [vmem:[%s2] sm:$0xff]
    %v52 = vld [vmem:[%s2 + $0x8] sm:$0xff]
    %54 = vset.pattern.permute.xlu0 0
    %55 = vperm.xlu0 %54, %v51
    %v56 = vpop.permute.xlu0 %55
    %59 = vset.pattern.permute.xlu0 0
    %60 = vperm.xlu0 %59, %v52
    %v61 = vpop.permute.xlu0 %60
    %vm63 = vcmask 244736
    %v65 = vsel %vm63, %v49, 0
    %v68 = vsel %vm63, %v50, 0
    %v71 = vsel %vm63, %v33, 0
    %v74 = vsel %vm63, %v34, 0
    %v77 = vsel %vm63, %v35, 0
    %v80 = vsel %vm63, %v36, 0
    %v83 = vsel %vm63, %v37, 0
    %v86 = vsel %vm63, %v38, 0
    %v89 = vsel %vm63, %v39, 0
    %v92 = vsel %vm63, %v40, 0
    %v95 = vsel %vm63, %v41, 0
    %v98 = vsel %vm63, %v42, 0
    %v101 = vsel %vm63, %v43, 0
    %v104 = vsel %vm63, %v44, 0
    %v107 = vsel %vm63, %v45, 0
    %v110 = vsel %vm63, %v46, 0
    %v113 = vsel %vm63, %v47, 0
    %v116 = vsel %vm63, %v48, 0
    %118 = vmatprep.subr.mxu0 0.0
    %119 = vmatpush1.xpose.msra.mxu0 %v116
    %120 = vmatprep.subr.mxu0 0.0
    %121 = vmatpush1.xpose.msra.mxu0 %v113
    %122 = vmatprep.subr.mxu0 0.0
    %123 = vmatpush1.xpose.msra.mxu0 %v110
    %124 = vmatprep.subr.mxu0 0.0
    %125 = vmatpush1.xpose.msra.mxu0 %v107
    %126 = vmatprep.subr.mxu0 0.0
    %127 = vmatpush1.xpose.msra.mxu0 %v104
    %128 = vmatprep.subr.mxu0 0.0
    %129 = vmatpush1.xpose.msra.mxu0 %v101
    %130 = vmatprep.subr.mxu0 0.0
    %131 = vmatpush1.xpose.msra.mxu0 %v98
    %132 = vmatprep.subr.mxu0 0.0
    %133 = vmatpush1.xpose.msra.mxu0 %v95
    %134 = vmatprep.subr.mxu0 0.0
    %135 = vmatpush1.xpose.msra.mxu0 %v92
    %136 = vmatprep.subr.mxu0 0.0
    %137 = vmatpush1.xpose.msra.mxu0 %v89
    %138 = vmatprep.subr.mxu0 0.0
    %139 = vmatpush1.xpose.msra.mxu0 %v86
    %140 = vmatprep.subr.mxu0 0.0
    %141 = vmatpush1.xpose.msra.mxu0 %v83
    %142 = vmatprep.subr.mxu0 0.0
    %143 = vmatpush1.xpose.msra.mxu0 %v80
    %144 = vmatprep.subr.mxu0 0.0
    %145 = vmatpush1.xpose.msra.mxu0 %v77
    %146 = vmatprep.subr.mxu0 0.0
    %147 = vmatpush1.xpose.msra.mxu0 %v74
    %148 = vmatprep.subr.mxu0 0.0
    %149 = vmatpush1.xpose.msra.mxu0 %v71
    %150 = vmatprep.subr.mxu0 0.0
    %151 = vmatpush2.xpose.msra.mxu0 0.0
    %152 = vmatprep.subr.mxu0 0.0
    %153 = vmatpush2.xpose.msra.mxu0 0.0
    %154 = vmatprep.subr.mxu0 0.0
    %155 = vmatpush2.xpose.msra.mxu0 0.0
    %156 = vmatprep.subr.mxu0 0.0
    %157 = vmatpush2.xpose.msra.mxu0 0.0
    %158 = vmatprep.subr.mxu0 0.0
    %159 = vmatpush2.xpose.msra.mxu0 0.0
    %160 = vmatprep.subr.mxu0 0.0
    %161 = vmatpush2.xpose.msra.mxu0 0.0
    %162 = vmatprep.subr.mxu0 0.0
    %163 = vmatpush2.xpose.msra.mxu0 0.0
    %164 = vmatprep.subr.mxu0 0.0
    %165 = vmatpush2.xpose.msra.mxu0 0.0
    %166 = vmatprep.subr.mxu0 0.0
    %167 = vmatpush2.xpose.msra.mxu0 0.0
    %168 = vmatprep.subr.mxu0 0.0
    %169 = vmatpush2.xpose.msra.mxu0 0.0
    %170 = vmatprep.subr.mxu0 0.0
    %171 = vmatpush2.xpose.msra.mxu0 0.0
    %172 = vmatprep.subr.mxu0 0.0
    %173 = vmatpush2.xpose.msra.mxu0 0.0
    %174 = vmatprep.subr.mxu0 0.0
    %175 = vmatpush2.xpose.msra.mxu0 0.0
    %176 = vmatprep.subr.mxu0 0.0
    %177 = vmatpush2.xpose.msra.mxu0 0.0
    %178 = vmatprep.subr.mxu0 0.0
    %179 = vmatpush2.xpose.msra.mxu0 0.0
    %180 = vmatprep.subr.mxu0 0.0
    %181 = vmatpush2.xpose.msra.mxu0 0.0
    %182 = vmatprep.mubr.f32.mxu0 0.0
    %183 = vmatmul.mubr.f32.gmra.mxu0 %v65
    %v184 = vpop.f32.mrf.mxu0
    %v185 = vadd.f32 %v56, %v184
    %v186 = vpop.f32.mrf.mxu0
    %187 = vmatprep.mubr.f32.mxu0 0.0
    %188 = vmatmul.mubr.f32.gmra.mxu0 %v68
    %v189 = vpop.f32.mrf.mxu0
    %v190 = vadd.f32 %v61, %v189
    %v191 = vpop.f32.mrf.mxu0
    %192 = vdwg.mxu0
    %v193 = vmax.f32 %v185, 0.0
    %v194 = vmax.f32 %v190, 0.0
    %v195 = vld [vmem:[%s3] sm:$0xff]
    %v196 = vld [vmem:[%s4] sm:$0xff]
    %198 = vset.pattern.permute.xlu0 0
    %199 = vperm.xlu0 %198, %v196
    %v200 = vpop.permute.xlu0 %199
    %vm202 = vcmask 130048
    %v204 = vsel %vm202, %v195, 0
    %206 = vmatprep.subr.mxu0 0.0
    %207 = vmatpush1.msra.mxu0 0.0
    %208 = vmatprep.subr.mxu0 0.0
    %209 = vmatpush1.msra.mxu0 0.0
    %210 = vmatprep.subr.mxu0 0.0
    %211 = vmatpush1.msra.mxu0 0.0
    %212 = vmatprep.subr.mxu0 0.0
    %213 = vmatpush1.msra.mxu0 0.0
    %214 = vmatprep.subr.mxu0 0.0
    %215 = vmatpush1.msra.mxu0 0.0
    %216 = vmatprep.subr.mxu0 0.0
    %217 = vmatpush1.msra.mxu0 0.0
    %218 = vmatprep.subr.mxu0 0.0
    %219 = vmatpush1.msra.mxu0 0.0
    %220 = vmatprep.subr.mxu0 0.0
    %221 = vmatpush1.msra.mxu0 0.0
    %222 = vmatprep.subr.mxu0 0.0
    %223 = vmatpush1.msra.mxu0 0.0
    %224 = vmatprep.subr.mxu0 0.0
    %225 = vmatpush1.msra.mxu0 0.0
    %226 = vmatprep.subr.mxu0 0.0
    %227 = vmatpush1.msra.mxu0 0.0
    %228 = vmatprep.subr.mxu0 0.0
    %229 = vmatpush1.msra.mxu0 0.0
    %230 = vmatprep.subr.mxu0 0.0
    %231 = vmatpush1.msra.mxu0 0.0
    %232 = vmatprep.subr.mxu0 0.0
    %233 = vmatpush1.msra.mxu0 0.0
    %234 = vmatprep.subr.mxu0 0.0
    %235 = vmatpush1.msra.mxu0 %v194
    %236 = vmatprep.subr.mxu0 0.0
    %237 = vmatpush1.msra.mxu0 %v193
    %238 = vmatprep.subr.mxu0 0.0
    %239 = vmatpush2.msra.mxu0 0.0
    %240 = vmatprep.subr.mxu0 0.0
    %241 = vmatpush2.msra.mxu0 0.0
    %242 = vmatprep.subr.mxu0 0.0
    %243 = vmatpush2.msra.mxu0 0.0
    %244 = vmatprep.subr.mxu0 0.0
    %245 = vmatpush2.msra.mxu0 0.0
    %246 = vmatprep.subr.mxu0 0.0
    %247 = vmatpush2.msra.mxu0 0.0
    %248 = vmatprep.subr.mxu0 0.0
    %249 = vmatpush2.msra.mxu0 0.0
    %250 = vmatprep.subr.mxu0 0.0
    %251 = vmatpush2.msra.mxu0 0.0
    %252 = vmatprep.subr.mxu0 0.0
    %253 = vmatpush2.msra.mxu0 0.0
    %254 = vmatprep.subr.mxu0 0.0
    %255 = vmatpush2.msra.mxu0 0.0
    %256 = vmatprep.subr.mxu0 0.0
    %257 = vmatpush2.msra.mxu0 0.0
    %258 = vmatprep.subr.mxu0 0.0
    %259 = vmatpush2.msra.mxu0 0.0
    %260 = vmatprep.subr.mxu0 0.0
    %261 = vmatpush2.msra.mxu0 0.0
    %262 = vmatprep.subr.mxu0 0.0
    %263 = vmatpush2.msra.mxu0 0.0
    %264 = vmatprep.subr.mxu0 0.0
    %265 = vmatpush2.msra.mxu0 0.0
    %266 = vmatprep.subr.mxu0 0.0
    %267 = vmatpush2.msra.mxu0 0.0
    %268 = vmatprep.subr.mxu0 0.0
    %269 = vmatpush2.msra.mxu0 0.0
    %270 = vmatprep.mubr.f32.mxu0 0.0
    %271 = vmatmul.mubr.f32.gmra.mxu0 %v204
    %v272 = vpop.f32.mrf.mxu0
    %v273 = vadd.f32 %v200, %v272
    %v274 = vpop.f32.mrf.mxu0
    %275 = vdwg.mxu0
    %v276 = vmax.f32 %v273, 0.0
    %v277 = vld [vmem:[%s5] sm:$0xff]
    %v278 = vld [vmem:[%s6] sm:$0xff]
    %280 = vset.pattern.permute.xlu0 0
    %281 = vperm.xlu0 %280, %v278
    %v282 = vpop.permute.xlu0 %281
    %vm284 = vcmask 64512
    %v286 = vsel %vm284, %v277, 0
    %288 = vmatprep.subr.mxu0 0.0
    %289 = vmatpush1.msra.mxu0 0.0
    %290 = vmatprep.subr.mxu0 0.0
    %291 = vmatpush1.msra.mxu0 0.0
    %292 = vmatprep.subr.mxu0 0.0
    %293 = vmatpush1.msra.mxu0 0.0
    %294 = vmatprep.subr.mxu0 0.0
    %295 = vmatpush1.msra.mxu0 0.0
    %296 = vmatprep.subr.mxu0 0.0
    %297 = vmatpush1.msra.mxu0 0.0
    %298 = vmatprep.subr.mxu0 0.0
    %299 = vmatpush1.msra.mxu0 0.0
    %300 = vmatprep.subr.mxu0 0.0
    %301 = vmatpush1.msra.mxu0 0.0
    %302 = vmatprep.subr.mxu0 0.0
    %303 = vmatpush1.msra.mxu0 0.0
    %304 = vmatprep.subr.mxu0 0.0
    %305 = vmatpush1.msra.mxu0 0.0
    %306 = vmatprep.subr.mxu0 0.0
    %307 = vmatpush1.msra.mxu0 0.0
    %308 = vmatprep.subr.mxu0 0.0
    %309 = vmatpush1.msra.mxu0 0.0
    %310 = vmatprep.subr.mxu0 0.0
    %311 = vmatpush1.msra.mxu0 0.0
    %312 = vmatprep.subr.mxu0 0.0
    %313 = vmatpush1.msra.mxu0 0.0
    %314 = vmatprep.subr.mxu0 0.0
    %315 = vmatpush1.msra.mxu0 0.0
    %316 = vmatprep.subr.mxu0 0.0
    %317 = vmatpush1.msra.mxu0 0.0
    %318 = vmatprep.subr.mxu0 0.0
    %319 = vmatpush1.msra.mxu0 %v276
    %320 = vmatprep.subr.mxu0 0.0
    %321 = vmatpush2.msra.mxu0 0.0
    %322 = vmatprep.subr.mxu0 0.0
    %323 = vmatpush2.msra.mxu0 0.0
    %324 = vmatprep.subr.mxu0 0.0
    %325 = vmatpush2.msra.mxu0 0.0
    %326 = vmatprep.subr.mxu0 0.0
    %327 = vmatpush2.msra.mxu0 0.0
    %328 = vmatprep.subr.mxu0 0.0
    %329 = vmatpush2.msra.mxu0 0.0
    %330 = vmatprep.subr.mxu0 0.0
    %331 = vmatpush2.msra.mxu0 0.0
    %332 = vmatprep.subr.mxu0 0.0
    %333 = vmatpush2.msra.mxu0 0.0
    %334 = vmatprep.subr.mxu0 0.0
    %335 = vmatpush2.msra.mxu0 0.0
    %336 = vmatprep.subr.mxu0 0.0
    %337 = vmatpush2.msra.mxu0 0.0
    %338 = vmatprep.subr.mxu0 0.0
    %339 = vmatpush2.msra.mxu0 0.0
    %340 = vmatprep.subr.mxu0 0.0
    %341 = vmatpush2.msra.mxu0 0.0
    %342 = vmatprep.subr.mxu0 0.0
    %343 = vmatpush2.msra.mxu0 0.0
    %344 = vmatprep.subr.mxu0 0.0
    %345 = vmatpush2.msra.mxu0 0.0
    %346 = vmatprep.subr.mxu0 0.0
    %347 = vmatpush2.msra.mxu0 0.0
    %348 = vmatprep.subr.mxu0 0.0
    %349 = vmatpush2.msra.mxu0 0.0
    %350 = vmatprep.subr.mxu0 0.0
    %351 = vmatpush2.msra.mxu0 0.0
    %352 = vmatprep.mubr.f32.mxu0 0.0
    %353 = vmatmul.mubr.f32.gmra.mxu0 %v286
    %v354 = vpop.f32.mrf.mxu0
    %v355 = vadd.f32 %v282, %v354
    %v356 = vpop.f32.mrf.mxu0
    %357 = vdwg.mxu0
    %v358 = vmax.f32 %v355, 0.0
    %v359 = vld [vmem:[%s7] sm:$0x7]
    %v360 = vld [vmem:[%s8] sm:$0x7]
    %362 = vset.pattern.permute.xlu0 0
    %363 = vperm.xlu0 %362, %v360
    %v364 = vpop.permute.xlu0 %363
    %v367 = vsel %vm284, %v359, 0
    %369 = vmatprep.subr.mxu0 0.0
    %370 = vmatpush1.msra.mxu0 0.0
    %371 = vmatprep.subr.mxu0 0.0
    %372 = vmatpush1.msra.mxu0 0.0
    %373 = vmatprep.subr.mxu0 0.0
    %374 = vmatpush1.msra.mxu0 0.0
    %375 = vmatprep.subr.mxu0 0.0
    %376 = vmatpush1.msra.mxu0 0.0
    %377 = vmatprep.subr.mxu0 0.0
    %378 = vmatpush1.msra.mxu0 0.0
    %379 = vmatprep.subr.mxu0 0.0
    %380 = vmatpush1.msra.mxu0 0.0
    %381 = vmatprep.subr.mxu0 0.0
    %382 = vmatpush1.msra.mxu0 0.0
    %383 = vmatprep.subr.mxu0 0.0
    %384 = vmatpush1.msra.mxu0 0.0
    %385 = vmatprep.subr.mxu0 0.0
    %386 = vmatpush1.msra.mxu0 0.0
    %387 = vmatprep.subr.mxu0 0.0
    %388 = vmatpush1.msra.mxu0 0.0
    %389 = vmatprep.subr.mxu0 0.0
    %390 = vmatpush1.msra.mxu0 0.0
    %391 = vmatprep.subr.mxu0 0.0
    %392 = vmatpush1.msra.mxu0 0.0
    %393 = vmatprep.subr.mxu0 0.0
    %394 = vmatpush1.msra.mxu0 0.0
    %395 = vmatprep.subr.mxu0 0.0
    %396 = vmatpush1.msra.mxu0 0.0
    %397 = vmatprep.subr.mxu0 0.0
    %398 = vmatpush1.msra.mxu0 0.0
    %399 = vmatprep.subr.mxu0 0.0
    %400 = vmatpush1.msra.mxu0 %v358
    %401 = vmatprep.subr.mxu0 0.0
    %402 = vmatpush2.msra.mxu0 0.0
    %403 = vmatprep.subr.mxu0 0.0
    %404 = vmatpush2.msra.mxu0 0.0
    %405 = vmatprep.subr.mxu0 0.0
    %406 = vmatpush2.msra.mxu0 0.0
    %407 = vmatprep.subr.mxu0 0.0
    %408 = vmatpush2.msra.mxu0 0.0
    %409 = vmatprep.subr.mxu0 0.0
    %410 = vmatpush2.msra.mxu0 0.0
    %411 = vmatprep.subr.mxu0 0.0
    %412 = vmatpush2.msra.mxu0 0.0
    %413 = vmatprep.subr.mxu0 0.0
    %414 = vmatpush2.msra.mxu0 0.0
    %415 = vmatprep.subr.mxu0 0.0
    %416 = vmatpush2.msra.mxu0 0.0
    %417 = vmatprep.subr.mxu0 0.0
    %418 = vmatpush2.msra.mxu0 0.0
    %419 = vmatprep.subr.mxu0 0.0
    %420 = vmatpush2.msra.mxu0 0.0
    %421 = vmatprep.subr.mxu0 0.0
    %422 = vmatpush2.msra.mxu0 0.0
    %423 = vmatprep.subr.mxu0 0.0
    %424 = vmatpush2.msra.mxu0 0.0
    %425 = vmatprep.subr.mxu0 0.0
    %426 = vmatpush2.msra.mxu0 0.0
    %427 = vmatprep.subr.mxu0 0.0
    %428 = vmatpush2.msra.mxu0 0.0
    %429 = vmatprep.subr.mxu0 0.0
    %430 = vmatpush2.msra.mxu0 0.0
    %431 = vmatprep.subr.mxu0 0.0
    %432 = vmatpush2.msra.mxu0 0.0
    %433 = vmatprep.mubr.f32.mxu0 0.0
    %434 = vmatmul.mubr.f32.gmra.mxu0 %v367
    %v435 = vpop.f32.mrf.mxu0
    %v436 = vadd.f32 %v364, %v435
    %v437 = vpop.f32.mrf.mxu0
    %438 = vdwg.mxu0
    %439 = vst [vmem:[#allocation2] sm:$0x7] %v436
    // Predicated region
    $region38: #{tpu_custom_call.1} parent=1 // pred_check
      _
    $region39: #{tpu_custom_call.1} parent=1 // pred_check_branch
      %441 = sbr.rel (0) target = $region41
    $region40: #{tpu_custom_call.1} parent=1 // pred_region
      %s443 = ssub.s32 64, 64
      %444 = vsyncadd [#allocation3], %s443
      %s446 = sshll.u32 [#allocation2], 4
      %s447 = int_to_ptr.vmem [resolvable:$true] %s446
      %449 = dma.vmem_to_hbm [thread:$0]  %s447, 64, %s9, [#allocation3]
    $region41: #{tpu_custom_call.1} parent=1 // pred_fallthru
      _
    // Predicated region
    $region42: #{tpu_custom_call.1} parent=1 // pred_check
      _
    $region43: #{tpu_custom_call.1} parent=1 // pred_check_branch
      %451 = sbr.rel (0) target = $region45
    $region44: #{tpu_custom_call.1} parent=1 // pred_region
      %452 = dma.done [#allocation3], 64
    $region45: #{tpu_custom_call.1} parent=1 // pred_fallthru
      _
    %453 = vsyncpa [#allocation3], 1

</llo_original>
